<compile_context>
chip_gen: v7x
topology: tpu7x:2x2x1
jax: 0.10.0
libtpu: 0.0.40
codegen_flags: <defaults>
</compile_context>

<pallas_src>
import jax
import jax.numpy as jnp
from jax import lax
from jax.experimental import pallas as pl
from jax.experimental.pallas import tpu as pltpu


def _round_up(a: int, b: int) -> int:
    return ((a + b - 1) // b) * b


def _default_tiles():
    """Generation-aware (tm, tn, tk).

    AI = tm*tn/(tm+tn) flop/byte must clear the compute/bandwidth ridge
    (~240 flop/B on v5e, ~620-680 on v6e / v7x-per-TC).  tk only amortizes
    the ~0.35us per-grid-step overhead, so it stays at 256.
    """
    try:
        kind = jax.devices()[0].device_kind.lower()
    except Exception:
        kind = ""
    if any(v in kind for v in ("v2", "v3", "v4", "v5")):
        # 512x512 -> AI=256 > v5e ridge; ~3 MiB VMEM, fits 16 MiB default.
        return 512, 512, 256
    # v6e / v7x: 1024x1024 -> AI=512 (~75-82% of MXU peak), ~10 MiB VMEM,
    # well inside v7x's 64 MiB/TC and v6e's 32 MiB scoped default.
    return 1024, 1024, 256


# ---------------------------------------------------------------------------
# Stage 1 (only when RHS tiles are re-used): softplus(W) -> bf16, run once.
# ---------------------------------------------------------------------------
def _softplus_kernel(w_ref, sp_ref):
    w = w_ref[...].astype(jnp.float32)
    # Numerically stable softplus == torch.nn.functional.softplus (beta=1).
    sp_ref[...] = jnp.logaddexp(w, 0.0).astype(sp_ref.dtype)


# ---------------------------------------------------------------------------
# Stage 2: tiled matmul  out[i, j] = sum_k x[i, k] * rhs[j, k]
# ---------------------------------------------------------------------------
def _make_matmul_kernel(fuse_softplus: bool, use_acc: bool):
    def kernel(x_ref, w_ref, o_ref, *scratch):
        acc_ref = scratch[0] if use_acc else o_ref

        @pl.when(pl.program_id(2) == 0)
        def _():
            acc_ref[...] = jnp.zeros_like(acc_ref)

        rhs = w_ref[...]
        if fuse_softplus:
            # Softplus on the raw weight tile; EUP work hidden under MXU/DMA.
            rhs = jnp.logaddexp(rhs.astype(jnp.float32), 0.0)
        rhs = rhs.astype(x_ref.dtype)

        # Contract K with K: MXU takes the (O, K)-layout RHS natively.
        acc_ref[...] += lax.dot_general(
            x_ref[...], rhs,
            dimension_numbers=(((1,), (1,)), ((), ())),
            preferred_element_type=jnp.float32,
        )

        if use_acc:
            @pl.when(pl.program_id(2) == pl.num_programs(2) - 1)
            def _():
                o_ref[...] = acc_ref[...].astype(o_ref.dtype)

    return kernel


def convex_linear(x: jax.Array, weight: jax.Array, *,
                  tm: int | None = None, tn: int | None = None,
                  tk: int | None = None,
                  mxu_dtype=jnp.bfloat16) -> jax.Array:
    """z = x @ softplus(weight.T); x: (N, in), weight: (out, in)."""
    n, k = x.shape
    o, k2 = weight.shape
    assert k == k2, "in_features mismatch"
    out_dtype = x.dtype

    d_tm, d_tn, d_tk = _default_tiles()
    tm = d_tm if tm is None else tm
    tn = d_tn if tn is None else tn
    tk = d_tk if tk is None else tk

    # Clamp tiles for small problems; keep sublane/lane alignment.
    tm = min(tm, _round_up(n, 16))    # sublane-aligned rows (bf16-safe)
    tn = min(tn, _round_up(o, 128))   # lane-dense output columns
    tk = min(tk, _round_up(k, 128))   # lane-dense contraction dim

    n_pad = _round_up(n, tm)
    o_pad = _round_up(o, tn)
    k_pad = _round_up(k, tk)

    # Pad only when necessary (each pad is an extra full HBM pass).
    # NOTE: softplus(0)=log(2) in padded rows/cols of softplus(W); harmless
    # because padded X columns are zero and padded output columns are sliced.
    x_p = x if (n_pad == n and k_pad == k) else jnp.pad(
        x, ((0, n_pad - n), (0, k_pad - k)))
    x_p = x_p.astype(mxu_dtype)
    w_p = weight if (o_pad == o and k_pad == k) else jnp.pad(
        weight, ((0, o_pad - o), (0, k_pad - k)))

    grid = (n_pad // tm, o_pad // tn, k_pad // tk)
    fuse_softplus = (grid[0] == 1)          # each RHS tile read exactly once
    use_acc = (out_dtype != jnp.float32)    # f32 out: accumulate into o_ref

    in_b = jnp.dtype(mxu_dtype).itemsize
    out_b = jnp.dtype(out_dtype).itemsize

    if fuse_softplus:
        rhs = w_p                            # raw weights; softplus in-kernel
        rhs_b = jnp.dtype(w_p.dtype).itemsize
    else:
        # Hoisted softplus(W) once, in f32, stored as bf16 for the MXU.
        s1_o, s1_k = tn, tk
        rhs = pl.pallas_call(
            _softplus_kernel,
            out_shape=jax.ShapeDtypeStruct((o_pad, k_pad), mxu_dtype),
            grid=(o_pad // s1_o, k_pad // s1_k),
            in_specs=[pl.BlockSpec((s1_o, s1_k), lambda i, j: (i, j))],
            out_specs=pl.BlockSpec((s1_o, s1_k), lambda i, j: (i, j)),
            compiler_params=pltpu.CompilerParams(
                dimension_semantics=("parallel", "parallel")),
            cost_estimate=pl.CostEstimate(
                flops=o_pad * k_pad,
                transcendentals=2 * o_pad * k_pad,
                bytes_accessed=o_pad * k_pad
                * (jnp.dtype(w_p.dtype).itemsize + in_b)),
        )(w_p)
        rhs_b = in_b

    kernel = _make_matmul_kernel(fuse_softplus, use_acc)
    scratch = [pltpu.VMEM((tm, tn), jnp.float32)] if use_acc else []

    # VMEM footprint: double-buffered inputs/outputs + optional accumulator.
    vmem_bytes = (2 * tm * tk * in_b + 2 * tn * tk * rhs_b
                  + 2 * tm * tn * out_b + (tm * tn * 4 if use_acc else 0))
    vmem_limit = min(max(int(vmem_bytes * 1.5) + (2 << 20), 16 << 20), 48 << 20)

    out_p = pl.pallas_call(
        kernel,
        out_shape=jax.ShapeDtypeStruct((n_pad, o_pad), out_dtype),
        grid_spec=pltpu.PrefetchScalarGridSpec(
            num_scalar_prefetch=0,
            grid=grid,
            in_specs=[
                pl.BlockSpec((tm, tk), lambda i, j, kk: (i, kk)),
                pl.BlockSpec((tn, tk), lambda i, j, kk: (j, kk)),
            ],
            out_specs=pl.BlockSpec((tm, tn), lambda i, j, kk: (i, j)),
            scratch_shapes=scratch,
        ),
        compiler_params=pltpu.CompilerParams(
            dimension_semantics=("parallel", "parallel", "arbitrary"),
            vmem_limit_bytes=vmem_limit),
        cost_estimate=pl.CostEstimate(
            flops=2 * n_pad * o_pad * k_pad,
            transcendentals=2 * o_pad * k_pad if fuse_softplus else 0,
            # Include the re-read factors (X read o_pad/tn times, RHS read
            # n_pad/tm times).
            bytes_accessed=(n_pad * k_pad * in_b * grid[1]
                            + o_pad * k_pad * rhs_b * grid[0]
                            + n_pad * o_pad * out_b)),
    )(x_p, rhs)

    if n_pad == n and o_pad == o:
        return out_p
    return out_p[:n, :o]


def kaiming_uniform(key, out_features, in_features, dtype=jnp.float32):
    # torch.nn.init.kaiming_uniform_ default: a=0, fan_in, leaky_relu
    # bound = sqrt(2) * sqrt(3 / fan_in) = sqrt(6 / fan_in)
    bound = jnp.sqrt(6.0 / in_features)
    return jax.random.uniform(
        key, (out_features, in_features), dtype=dtype, minval=-bound, maxval=bound
    )


def _assert_close(out, ref, tol=2e-2):
    # Scale-relative check (kernel feeds the MXU bf16 with f32 accumulation).
    err = float(jnp.max(jnp.abs(out - ref)))
    scale = float(jnp.max(jnp.abs(ref))) + 1e-6
    assert err / scale < tol, f"max abs err {err} vs scale {scale}"


if __name__ == "__main__":
    key = jax.random.PRNGKey(0)
    k_x, k_w, k_x2, k_w2 = jax.random.split(key, 4)

    # Case 1: small ICNN layer (module-sized shapes). Single i-block ->
    # fused path: softplus applied in-kernel, no sp intermediate in HBM.
    batch, in_features, out_features = 8, 32, 16
    x = jax.random.normal(k_x, (batch, in_features), dtype=jnp.float32)
    w = kaiming_uniform(k_w, out_features, in_features)
    out = jax.block_until_ready(convex_linear(x, w))
    ref = x @ jax.nn.softplus(w.T)
    assert out.shape == (batch, out_features)
    _assert_close(out, ref)

    # Case 2: force the two-stage path (hoisted softplus + multi-block
    # k-reduction accumulating directly into the f32 output block) by using
    # explicit small tiles at small shapes.
    n2, kf2, o2 = 64, 256, 384
    x2 = jax.random.normal(k_x2, (n2, kf2), dtype=jnp.float32)
    w2 = kaiming_uniform(k_w2, o2, kf2)
    out2 = jax.block_until_ready(convex_linear(x2, w2, tm=16, tn=128, tk=128))
    ref2 = x2 @ jax.nn.softplus(w2.T)
    assert out2.shape == (n2, o2)
    _assert_close(out2, ref2)

    print("KERNEL_OK")
</pallas_src>

<mosaic_0001>
module attributes {stable_mosaic.version = 11 : i64} {
  func.func @kernel(%arg0: i32, %arg1: i32, %arg2: i32, %arg3: memref<16x128xbf16, #tpu.memory_space<vmem>>, %arg4: memref<128x128xf32, #tpu.memory_space<vmem>>, %arg5: memref<16x128xf32, #tpu.memory_space<vmem>>) attributes {dimension_semantics = [#tpu.dimension_semantics<parallel>, #tpu.dimension_semantics<parallel>, #tpu.dimension_semantics<arbitrary>], iteration_bounds = array<i64: 1, 1, 1>, scalar_prefetch = 0 : i64, scratch_operands = 0 : i64, tpu.core_type = #tpu.core_type<tc>, window_params = [{transform_indices = @transform_0, window_bounds = array<i64: 16, 128>}, {transform_indices = @transform_1, window_bounds = array<i64: 128, 128>}, {transform_indices = @transform_2, window_bounds = array<i64: 16, 128>}]} {
    %c0_i32 = arith.constant 0 : i32
    %0 = arith.cmpi eq, %arg2, %c0_i32 : i32
    %1 = arith.extui %0 : i1 to i32
    %c0_i32_0 = arith.constant 0 : i32
    %2 = arith.cmpi ne, %1, %c0_i32_0 : i32
    scf.if %2 {
      %cst_10 = arith.constant 0.000000e+00 : f32
      %24 = vector.broadcast %cst_10 : f32 to vector<16x128xf32>
      %c0_11 = arith.constant 0 : index
      %c0_12 = arith.constant 0 : index
      %25 = vector.load %arg5[%c0_11, %c0_12] : memref<16x128xf32, #tpu.memory_space<vmem>>, vector<16x128xf32>
      tpu.vector_store %arg5[%c0_11, %c0_12], %24 {strides = array<i32>} : memref<16x128xf32, #tpu.memory_space<vmem>>, vector<16x128xf32>,
    } else {
    }
    %c0 = arith.constant 0 : index
    %c0_1 = arith.constant 0 : index
    %3 = vector.load %arg4[%c0, %c0_1] : memref<128x128xf32, #tpu.memory_space<vmem>>, vector<128x128xf32>
    %cst = arith.constant 0.000000e+00 : f32
    %4 = vector.broadcast %cst : f32 to vector<128x128xf32>
    %5 = arith.maximumf %3, %4 : vector<128x128xf32>
    %6 = vector.broadcast %cst : f32 to vector<128x128xf32>
    %7 = arith.subf %3, %6 : vector<128x128xf32>
    %8 = arith.cmpf one, %7, %7 : vector<128x128xf32>
    %9 = vector.broadcast %cst : f32 to vector<128x128xf32>
    %10 = arith.addf %3, %9 : vector<128x128xf32>
    %11 = math.absf %7 : vector<128x128xf32>
    %cst_2 = arith.constant 0.000000e+00 : f32
    %12 = vector.broadcast %cst_2 : f32 to vector<128x128xf32>
    %13 = arith.subf %12, %11 : vector<128x128xf32>
    %14 = math.exp %13 : vector<128x128xf32>
    %15 = math.log1p %14 : vector<128x128xf32>
    %16 = arith.addf %5, %15 : vector<128x128xf32>
    %17 = arith.select %8, %10, %16 : vector<128x128xi1>, vector<128x128xf32>
    %18 = arith.truncf %17 : vector<128x128xf32> to vector<128x128xbf16>
    %c0_3 = arith.constant 0 : index
    %c0_4 = arith.constant 0 : index
    %19 = vector.load %arg5[%c0_3, %c0_4] : memref<16x128xf32, #tpu.memory_space<vmem>>, vector<16x128xf32>
    %c0_5 = arith.constant 0 : index
    %c0_6 = arith.constant 0 : index
    %20 = vector.load %arg3[%c0_5, %c0_6] : memref<16x128xbf16, #tpu.memory_space<vmem>>, vector<16x128xbf16>
    %cst_7 = arith.constant dense<0.000000e+00> : vector<16x128xf32>
    %21 = tpu.matmul %20, %18, %cst_7 {dimension_numbers = #tpu.dot_dimension_numbers<[1], [1], [0], [0], [0, 0, 1, 0], [], []>} : vector<16x128xbf16>, vector<128x128xbf16>, vector<16x128xf32> -> vector<16x128xf32>
    %22 = arith.addf %19, %21 : vector<16x128xf32>
    %c0_8 = arith.constant 0 : index
    %c0_9 = arith.constant 0 : index
    %23 = vector.load %arg5[%c0_8, %c0_9] : memref<16x128xf32, #tpu.memory_space<vmem>>, vector<16x128xf32>
    tpu.vector_store %arg5[%c0_8, %c0_9], %22 {strides = array<i32>} : memref<16x128xf32, #tpu.memory_space<vmem>>, vector<16x128xf32>,
    return
  }
  func.func @transform_0(%arg0: i32, %arg1: i32, %arg2: i32) -> (i32, i32) {
    %c0_i32 = arith.constant 0 : i32
    return %arg0, %arg2 : i32, i32
  }
  func.func @transform_1(%arg0: i32, %arg1: i32, %arg2: i32) -> (i32, i32) {
    %c0_i32 = arith.constant 0 : i32
    return %arg1, %arg2 : i32, i32
  }
  func.func @transform_2(%arg0: i32, %arg1: i32, %arg2: i32) -> (i32, i32) {
    %c0_i32 = arith.constant 0 : i32
    return %arg0, %arg1 : i32, i32
  }
}

</mosaic_0001>

<llo_original>
// kernel: tpu_custom_call.1
$region0: #{tpu_custom_call.1}
  #allocation0 [shape = 'u32[]', space=smem, size = 0x4, offset = 0x4, fixed_abs, tag = 'smem constant byte address 0x4 - core index']
  #allocation1 [shape = 'u32[144,128]{1,0:T(1,128)}', space=vmem, size = 0x12000, scoped, tag = 'internal scratch']
  %s0 = inlined_call_operand.hbm [shape: bf16[16,128], index: 0, kind: input, shape index: {}]
  %s1 = inlined_call_operand.hbm [shape: f32[128,128], index: 1, kind: input, shape index: {}]
  %s2 = inlined_call_operand.hbm [shape: f32[16,128], index: 2, kind: output, shape index: {}]
  %s3 = sld [smem:[#allocation0]]
  $region30: #{tpu_custom_call.1} parent=0
    _
  %s5 = ssub.s32 1, %s3
  %s6 = scalar_select 0, %s5, %s3
  $region1: #{tpu_custom_call.1} parent=0
    #allocation2 [shape = 'u8[4096]{0}', space=vmem, size = 0x1000, scoped, tag = 'input window, operand 0, single buffered']
    #allocation3 [shape = 's32[1]{0}', space=sflag, size = 0x4, scoped, tag = 'scoped memory for tpu_custom_call.1']
    #allocation4 [shape = 's32[1]{0}', space=sflag, size = 0x4, scoped, tag = 'scoped memory for tpu_custom_call.1']
    #allocation5 [shape = 'u8[65536]{0}', space=vmem, size = 0x10000, scoped, tag = 'input window, operand 1, single buffered']
    #allocation6 [shape = 's32[1]{0}', space=sflag, size = 0x4, scoped, tag = 'scoped memory for tpu_custom_call.1']
    #allocation7 [shape = 'u8[8192]{0}', space=vmem, size = 0x2000, scoped, tag = 'output window, operand 0, single buffered']
    %7 = vsyncpa [#allocation3], 0
    %8 = vsyncpa [#allocation6], 0
    %9 = vsyncpa [#allocation4], 0
    // Predicated region
    $region2: #{tpu_custom_call.1} parent=1 // pred_check
      _
    $region3: #{tpu_custom_call.1} parent=1 // pred_check_branch
      %11 = sbr.rel (0) target = $region5
    $region4: #{tpu_custom_call.1} parent=1 // pred_region
      %s13 = ssub.s32 128, 128
      %14 = vsyncadd [#allocation3], %s13
      %s15 = sshll.u32 [#allocation2], 4
      %s16 = int_to_ptr.vmem [resolvable:$true] %s15
      %21 = dma.hbm_to_vmem [thread:$0]  %s0, 128, %s16, [#allocation3], 64, 64, 4
    $region5: #{tpu_custom_call.1} parent=1 // pred_fallthru
      _
    // Predicated region
    $region6: #{tpu_custom_call.1} parent=1 // pred_check
      _
    $region7: #{tpu_custom_call.1} parent=1 // pred_check_branch
      %23 = sbr.rel (0) target = $region9
    $region8: #{tpu_custom_call.1} parent=1 // pred_region
      %s25 = ssub.s32 2048, 2048
      %26 = vsyncadd [#allocation6], %s25
      %s27 = sshll.u32 [#allocation5], 4
      %s28 = int_to_ptr.vmem [resolvable:$true] %s27
      %33 = dma.hbm_to_vmem [thread:$0]  %s1, 2048, %s28, [#allocation6], 128, 128, 8
    $region9: #{tpu_custom_call.1} parent=1 // pred_fallthru
      _
    // Predicated region
    $region10: #{tpu_custom_call.1} parent=1 // pred_check
      _
    $region11: #{tpu_custom_call.1} parent=1 // pred_check_branch
      %35 = sbr.rel (0) target = $region13
    $region12: #{tpu_custom_call.1} parent=1 // pred_region
      %36 = dma.done [#allocation3], 128
    $region13: #{tpu_custom_call.1} parent=1 // pred_fallthru
      _
    // Predicated region
    $region14: #{tpu_custom_call.1} parent=1 // pred_check
      _
    $region15: #{tpu_custom_call.1} parent=1 // pred_check_branch
      %38 = sbr.rel (0) target = $region17
    $region16: #{tpu_custom_call.1} parent=1 // pred_region
      %39 = dma.done [#allocation6], 2048
    $region17: #{tpu_custom_call.1} parent=1 // pred_fallthru
      _
    %p41 = scmp.eq.s32.totalorder 0, 0
    // Predicated region
    $region18: #{tpu_custom_call.1} parent=1 // pred_check
      %p42 = pneg %p41
    $region19: #{tpu_custom_call.1} parent=1 // pred_check_branch
      %44 = sbr.rel (%p42) target = $region21
    $region20: #{tpu_custom_call.1} parent=1 // pred_region
      %45 = vst [vmem:[#allocation7] sm:$0xff] 0.0
      %46 = vst [vmem:[#allocation7 + $0x8] sm:$0xff] 0.0
    $region21: #{tpu_custom_call.1} parent=1 // pred_fallthru
      _
    %v47 = vld [vmem:[#allocation5] sm:$0xff]
    %v48 = vld [vmem:[#allocation5 + $0x8] sm:$0xff]
    %v49 = vld [vmem:[#allocation5 + $0x10] sm:$0xff]
    %v50 = vld [vmem:[#allocation5 + $0x18] sm:$0xff]
    %v51 = vld [vmem:[#allocation5 + $0x20] sm:$0xff]
    %v52 = vld [vmem:[#allocation5 + $0x28] sm:$0xff]
    %v53 = vld [vmem:[#allocation5 + $0x30] sm:$0xff]
    %v54 = vld [vmem:[#allocation5 + $0x38] sm:$0xff]
    %v55 = vld [vmem:[#allocation5 + $0x40] sm:$0xff]
    %v56 = vld [vmem:[#allocation5 + $0x48] sm:$0xff]
    %v57 = vld [vmem:[#allocation5 + $0x50] sm:$0xff]
    %v58 = vld [vmem:[#allocation5 + $0x58] sm:$0xff]
    %v59 = vld [vmem:[#allocation5 + $0x60] sm:$0xff]
    %v60 = vld [vmem:[#allocation5 + $0x68] sm:$0xff]
    %v61 = vld [vmem:[#allocation5 + $0x70] sm:$0xff]
    %v62 = vld [vmem:[#allocation5 + $0x78] sm:$0xff]
    %v63 = vmax.f32 %v47, 0.0
    %v64 = vmax.f32 %v48, 0.0
    %v65 = vmax.f32 %v49, 0.0
    %v66 = vmax.f32 %v50, 0.0
    %v67 = vmax.f32 %v51, 0.0
    %v68 = vmax.f32 %v52, 0.0
    %v69 = vmax.f32 %v53, 0.0
    %v70 = vmax.f32 %v54, 0.0
    %v71 = vmax.f32 %v55, 0.0
    %v72 = vmax.f32 %v56, 0.0
    %v73 = vmax.f32 %v57, 0.0
    %v74 = vmax.f32 %v58, 0.0
    %v75 = vmax.f32 %v59, 0.0
    %v76 = vmax.f32 %v60, 0.0
    %v77 = vmax.f32 %v61, 0.0
    %v78 = vmax.f32 %v62, 0.0
    %vm79 = vcmp.ne.f32.partialorder %v47, %v47
    %vm80 = vcmp.ne.f32.partialorder %v48, %v48
    %vm81 = vcmp.ne.f32.partialorder %v49, %v49
    %vm82 = vcmp.ne.f32.partialorder %v50, %v50
    %vm83 = vcmp.ne.f32.partialorder %v51, %v51
    %vm84 = vcmp.ne.f32.partialorder %v52, %v52
    %vm85 = vcmp.ne.f32.partialorder %v53, %v53
    %vm86 = vcmp.ne.f32.partialorder %v54, %v54
    %vm87 = vcmp.ne.f32.partialorder %v55, %v55
    %vm88 = vcmp.ne.f32.partialorder %v56, %v56
    %vm89 = vcmp.ne.f32.partialorder %v57, %v57
    %vm90 = vcmp.ne.f32.partialorder %v58, %v58
    %vm91 = vcmp.ne.f32.partialorder %v59, %v59
    %vm92 = vcmp.ne.f32.partialorder %v60, %v60
    %vm93 = vcmp.ne.f32.partialorder %v61, %v61
    %vm94 = vcmp.ne.f32.partialorder %v62, %v62
    %v95 = vadd.f32 %v47, 0.0
    %v96 = vadd.f32 %v48, 0.0
    %v97 = vadd.f32 %v49, 0.0
    %v98 = vadd.f32 %v50, 0.0
    %v99 = vadd.f32 %v51, 0.0
    %v100 = vadd.f32 %v52, 0.0
    %v101 = vadd.f32 %v53, 0.0
    %v102 = vadd.f32 %v54, 0.0
    %v103 = vadd.f32 %v55, 0.0
    %v104 = vadd.f32 %v56, 0.0
    %v105 = vadd.f32 %v57, 0.0
    %v106 = vadd.f32 %v58, 0.0
    %v107 = vadd.f32 %v59, 0.0
    %v108 = vadd.f32 %v60, 0.0
    %v109 = vadd.f32 %v61, 0.0
    %v110 = vadd.f32 %v62, 0.0
    %v111 = vand.u32 2147483647, %v47
    %v112 = vand.u32 2147483647, %v48
    %v113 = vand.u32 2147483647, %v49
    %v114 = vand.u32 2147483647, %v50
    %v115 = vand.u32 2147483647, %v51
    %v116 = vand.u32 2147483647, %v52
    %v117 = vand.u32 2147483647, %v53
    %v118 = vand.u32 2147483647, %v54
    %v119 = vand.u32 2147483647, %v55
    %v120 = vand.u32 2147483647, %v56
    %v121 = vand.u32 2147483647, %v57
    %v122 = vand.u32 2147483647, %v58
    %v123 = vand.u32 2147483647, %v59
    %v124 = vand.u32 2147483647, %v60
    %v125 = vand.u32 2147483647, %v61
    %v126 = vand.u32 2147483647, %v62
    %v127 = vsub.f32 0.0, %v111
    %v128 = vsub.f32 0.0, %v112
    %v129 = vsub.f32 0.0, %v113
    %v130 = vsub.f32 0.0, %v114
    %v131 = vsub.f32 0.0, %v115
    %v132 = vsub.f32 0.0, %v116
    %v133 = vsub.f32 0.0, %v117
    %v134 = vsub.f32 0.0, %v118
    %v135 = vsub.f32 0.0, %v119
    %v136 = vsub.f32 0.0, %v120
    %v137 = vsub.f32 0.0, %v121
    %v138 = vsub.f32 0.0, %v122
    %v139 = vsub.f32 0.0, %v123
    %v140 = vsub.f32 0.0, %v124
    %v141 = vsub.f32 0.0, %v125
    %v142 = vsub.f32 0.0, %v126
    %v143 = vmul.f32 %v127, 1.442695
    %v144 = vpow.pop %v143
    %v145 = vmul.f32 %v128, 1.442695
    %v146 = vpow.pop %v145
    %v147 = vmul.f32 %v129, 1.442695
    %v148 = vpow.pop %v147
    %v149 = vmul.f32 %v130, 1.442695
    %v150 = vpow.pop %v149
    %v151 = vmul.f32 %v131, 1.442695
    %v152 = vpow.pop %v151
    %v153 = vmul.f32 %v132, 1.442695
    %v154 = vpow.pop %v153
    %v155 = vmul.f32 %v133, 1.442695
    %v156 = vpow.pop %v155
    %v157 = vmul.f32 %v134, 1.442695
    %v158 = vpow.pop %v157
    %v159 = vmul.f32 %v135, 1.442695
    %v160 = vpow.pop %v159
    %v161 = vmul.f32 %v136, 1.442695
    %v162 = vpow.pop %v161
    %v163 = vmul.f32 %v137, 1.442695
    %v164 = vpow.pop %v163
    %v165 = vmul.f32 %v138, 1.442695
    %v166 = vpow.pop %v165
    %v167 = vmul.f32 %v139, 1.442695
    %v168 = vpow.pop %v167
    %v169 = vmul.f32 %v140, 1.442695
    %v170 = vpow.pop %v169
    %v171 = vmul.f32 %v141, 1.442695
    %v172 = vpow.pop %v171
    %v173 = vmul.f32 %v142, 1.442695
    %v174 = vpow.pop %v173
    %v175 = vadd.f32 %v144, 1.0
    %v176 = vlog2.pop %v175
    %v177 = vmul.f32 %v176, 0.6931472
    %v178 = vmul.f32 -0.5, %v144
    %v179 = vadd.f32 %v178, 1.0
    %v180 = vmul.f32 %v179, %v144
    %v181 = vand.u32 2147483647, %v144
    %vm182 = vcmp.lt.f32.partialorder %v181, 0.0004427343
    %v183 = vsel %vm182, %v180, %v177
    %v184 = vadd.f32 %v146, 1.0
    %v185 = vlog2.pop %v184
    %v186 = vmul.f32 %v185, 0.6931472
    %v187 = vmul.f32 -0.5, %v146
    %v188 = vadd.f32 %v187, 1.0
    %v189 = vmul.f32 %v188, %v146
    %v190 = vand.u32 2147483647, %v146
    %vm191 = vcmp.lt.f32.partialorder %v190, 0.0004427343
    %v192 = vsel %vm191, %v189, %v186
    %v193 = vadd.f32 %v148, 1.0
    %v194 = vlog2.pop %v193
    %v195 = vmul.f32 %v194, 0.6931472
    %v196 = vmul.f32 -0.5, %v148
    %v197 = vadd.f32 %v196, 1.0
    %v198 = vmul.f32 %v197, %v148
    %v199 = vand.u32 2147483647, %v148
    %vm200 = vcmp.lt.f32.partialorder %v199, 0.0004427343
    %v201 = vsel %vm200, %v198, %v195
    %v202 = vadd.f32 %v150, 1.0
    %v203 = vlog2.pop %v202
    %v204 = vmul.f32 %v203, 0.6931472
    %v205 = vmul.f32 -0.5, %v150
    %v206 = vadd.f32 %v205, 1.0
    %v207 = vmul.f32 %v206, %v150
    %v208 = vand.u32 2147483647, %v150
    %vm209 = vcmp.lt.f32.partialorder %v208, 0.0004427343
    %v210 = vsel %vm209, %v207, %v204
    %v211 = vadd.f32 %v152, 1.0
    %v212 = vlog2.pop %v211
    %v213 = vmul.f32 %v212, 0.6931472
    %v214 = vmul.f32 -0.5, %v152
    %v215 = vadd.f32 %v214, 1.0
    %v216 = vmul.f32 %v215, %v152
    %v217 = vand.u32 2147483647, %v152
    %vm218 = vcmp.lt.f32.partialorder %v217, 0.0004427343
    %v219 = vsel %vm218, %v216, %v213
    %v220 = vadd.f32 %v154, 1.0
    %v221 = vlog2.pop %v220
    %v222 = vmul.f32 %v221, 0.6931472
    %v223 = vmul.f32 -0.5, %v154
    %v224 = vadd.f32 %v223, 1.0
    %v225 = vmul.f32 %v224, %v154
    %v226 = vand.u32 2147483647, %v154
    %vm227 = vcmp.lt.f32.partialorder %v226, 0.0004427343
    %v228 = vsel %vm227, %v225, %v222
    %v229 = vadd.f32 %v156, 1.0
    %v230 = vlog2.pop %v229
    %v231 = vmul.f32 %v230, 0.6931472
    %v232 = vmul.f32 -0.5, %v156
    %v233 = vadd.f32 %v232, 1.0
    %v234 = vmul.f32 %v233, %v156
    %v235 = vand.u32 2147483647, %v156
    %vm236 = vcmp.lt.f32.partialorder %v235, 0.0004427343
    %v237 = vsel %vm236, %v234, %v231
    %v238 = vadd.f32 %v158, 1.0
    %v239 = vlog2.pop %v238
    %v240 = vmul.f32 %v239, 0.6931472
    %v241 = vmul.f32 -0.5, %v158
    %v242 = vadd.f32 %v241, 1.0
    %v243 = vmul.f32 %v242, %v158
    %v244 = vand.u32 2147483647, %v158
    %vm245 = vcmp.lt.f32.partialorder %v244, 0.0004427343
    %v246 = vsel %vm245, %v243, %v240
    %v247 = vadd.f32 %v160, 1.0
    %v248 = vlog2.pop %v247
    %v249 = vmul.f32 %v248, 0.6931472
    %v250 = vmul.f32 -0.5, %v160
    %v251 = vadd.f32 %v250, 1.0
    %v252 = vmul.f32 %v251, %v160
    %v253 = vand.u32 2147483647, %v160
    %vm254 = vcmp.lt.f32.partialorder %v253, 0.0004427343
    %v255 = vsel %vm254, %v252, %v249
    %v256 = vadd.f32 %v162, 1.0
    %v257 = vlog2.pop %v256
    %v258 = vmul.f32 %v257, 0.6931472
    %v259 = vmul.f32 -0.5, %v162
    %v260 = vadd.f32 %v259, 1.0
    %v261 = vmul.f32 %v260, %v162
    %v262 = vand.u32 2147483647, %v162
    %vm263 = vcmp.lt.f32.partialorder %v262, 0.0004427343
    %v264 = vsel %vm263, %v261, %v258
    %v265 = vadd.f32 %v164, 1.0
    %v266 = vlog2.pop %v265
    %v267 = vmul.f32 %v266, 0.6931472
    %v268 = vmul.f32 -0.5, %v164
    %v269 = vadd.f32 %v268, 1.0
    %v270 = vmul.f32 %v269, %v164
    %v271 = vand.u32 2147483647, %v164
    %vm272 = vcmp.lt.f32.partialorder %v271, 0.0004427343
    %v273 = vsel %vm272, %v270, %v267
    %v274 = vadd.f32 %v166, 1.0
    %v275 = vlog2.pop %v274
    %v276 = vmul.f32 %v275, 0.6931472
    %v277 = vmul.f32 -0.5, %v166
    %v278 = vadd.f32 %v277, 1.0
    %v279 = vmul.f32 %v278, %v166
    %v280 = vand.u32 2147483647, %v166
    %vm281 = vcmp.lt.f32.partialorder %v280, 0.0004427343
    %v282 = vsel %vm281, %v279, %v276
    %v283 = vadd.f32 %v168, 1.0
    %v284 = vlog2.pop %v283
    %v285 = vmul.f32 %v284, 0.6931472
    %v286 = vmul.f32 -0.5, %v168
    %v287 = vadd.f32 %v286, 1.0
    %v288 = vmul.f32 %v287, %v168
    %v289 = vand.u32 2147483647, %v168
    %vm290 = vcmp.lt.f32.partialorder %v289, 0.0004427343
    %v291 = vsel %vm290, %v288, %v285
    %v292 = vadd.f32 %v170, 1.0
    %v293 = vlog2.pop %v292
    %v294 = vmul.f32 %v293, 0.6931472
    %v295 = vmul.f32 -0.5, %v170
    %v296 = vadd.f32 %v295, 1.0
    %v297 = vmul.f32 %v296, %v170
    %v298 = vand.u32 2147483647, %v170
    %vm299 = vcmp.lt.f32.partialorder %v298, 0.0004427343
    %v300 = vsel %vm299, %v297, %v294
    %v301 = vadd.f32 %v172, 1.0
    %v302 = vlog2.pop %v301
    %v303 = vmul.f32 %v302, 0.6931472
    %v304 = vmul.f32 -0.5, %v172
    %v305 = vadd.f32 %v304, 1.0
    %v306 = vmul.f32 %v305, %v172
    %v307 = vand.u32 2147483647, %v172
    %vm308 = vcmp.lt.f32.partialorder %v307, 0.0004427343
    %v309 = vsel %vm308, %v306, %v303
    %v310 = vadd.f32 %v174, 1.0
    %v311 = vlog2.pop %v310
    %v312 = vmul.f32 %v311, 0.6931472
    %v313 = vmul.f32 -0.5, %v174
    %v314 = vadd.f32 %v313, 1.0
    %v315 = vmul.f32 %v314, %v174
    %v316 = vand.u32 2147483647, %v174
    %vm317 = vcmp.lt.f32.partialorder %v316, 0.0004427343
    %v318 = vsel %vm317, %v315, %v312
    %v319 = vadd.f32 %v63, %v183
    %v320 = vadd.f32 %v64, %v192
    %v321 = vadd.f32 %v65, %v201
    %v322 = vadd.f32 %v66, %v210
    %v323 = vadd.f32 %v67, %v219
    %v324 = vadd.f32 %v68, %v228
    %v325 = vadd.f32 %v69, %v237
    %v326 = vadd.f32 %v70, %v246
    %v327 = vadd.f32 %v71, %v255
    %v328 = vadd.f32 %v72, %v264
    %v329 = vadd.f32 %v73, %v273
    %v330 = vadd.f32 %v74, %v282
    %v331 = vadd.f32 %v75, %v291
    %v332 = vadd.f32 %v76, %v300
    %v333 = vadd.f32 %v77, %v309
    %v334 = vadd.f32 %v78, %v318
    %v335 = vsel %vm79, %v95, %v319
    %v336 = vsel %vm80, %v96, %v320
    %v337 = vsel %vm81, %v97, %v321
    %v338 = vsel %vm82, %v98, %v322
    %v339 = vsel %vm83, %v99, %v323
    %v340 = vsel %vm84, %v100, %v324
    %v341 = vsel %vm85, %v101, %v325
    %v342 = vsel %vm86, %v102, %v326
    %v343 = vsel %vm87, %v103, %v327
    %v344 = vsel %vm88, %v104, %v328
    %v345 = vsel %vm89, %v105, %v329
    %v346 = vsel %vm90, %v106, %v330
    %v347 = vsel %vm91, %v107, %v331
    %v348 = vsel %vm92, %v108, %v332
    %v349 = vsel %vm93, %v109, %v333
    %v350 = vsel %vm94, %v110, %v334
    %v351 = vpack.c.bf16 %v336, %v335
    %v352 = vpack.c.bf16 %v338, %v337
    %v353 = vpack.c.bf16 %v340, %v339
    %v354 = vpack.c.bf16 %v342, %v341
    %v355 = vpack.c.bf16 %v344, %v343
    %v356 = vpack.c.bf16 %v346, %v345
    %v357 = vpack.c.bf16 %v348, %v347
    %v358 = vpack.c.bf16 %v350, %v349
    %v359 = vld [vmem:[#allocation7] sm:$0xff]
    %v360 = vld [vmem:[#allocation7 + $0x8] sm:$0xff]
    %v361 = vld [vmem:[#allocation2] sm:$0xf]
    %v362 = vld [vmem:[#allocation2 + $0x4] sm:$0xf]
    %v365 = vunpack.c.l.b16 %v361
    %v366 = vunpack.c.l.b16 %v362
    %v367 = vpack.c.b16 %v366, %v365
    %369 = vmatprep.subr.bf16.mxu0 0
    %370 = vmatpush1.bf16.xpose.msra.mxu0 %v351
    %371 = vmatprep.subr.bf16.mxu0 0
    %372 = vmatpush1.bf16.xpose.msra.mxu0 %v352
    %373 = vmatprep.subr.bf16.mxu0 0
    %374 = vmatpush1.bf16.xpose.msra.mxu0 %v353
    %375 = vmatprep.subr.bf16.mxu0 0
    %376 = vmatpush1.bf16.xpose.msra.mxu0 %v354
    %377 = vmatprep.subr.bf16.mxu0 0
    %378 = vmatpush1.bf16.xpose.msra.mxu0 %v355
    %379 = vmatprep.subr.bf16.mxu0 0
    %380 = vmatpush1.bf16.xpose.msra.mxu0 %v356
    %381 = vmatprep.subr.bf16.mxu0 0
    %382 = vmatpush1.bf16.xpose.msra.mxu0 %v357
    %383 = vmatprep.subr.bf16.mxu0 0
    %384 = vmatpush1.bf16.xpose.msra.mxu0 %v358
    %385 = vmatprep.subr.bf16.mxu0 0
    %386 = vmatpush1.bf16.xpose.msra.mxu0 0
    %387 = vmatprep.subr.bf16.mxu0 0
    %388 = vmatpush1.bf16.xpose.msra.mxu0 0
    %389 = vmatprep.subr.bf16.mxu0 0
    %390 = vmatpush1.bf16.xpose.msra.mxu0 0
    %391 = vmatprep.subr.bf16.mxu0 0
    %392 = vmatpush1.bf16.xpose.msra.mxu0 0
    %393 = vmatprep.subr.bf16.mxu0 0
    %394 = vmatpush1.bf16.xpose.msra.mxu0 0
    %395 = vmatprep.subr.bf16.mxu0 0
    %396 = vmatpush1.bf16.xpose.msra.mxu0 0
    %397 = vmatprep.subr.bf16.mxu0 0
    %398 = vmatpush1.bf16.xpose.msra.mxu0 0
    %399 = vmatprep.subr.bf16.mxu0 0
    %400 = vmatpush1.bf16.xpose.msra.mxu0 0
    %401 = vmatprep.mubr.bf16.mxu0 0
    %402 = vmatmul.mubr.bf16.gmra.mrb[0].mxu0 %v367
    %v403 = vpop.f32.mrb[0].mxu0
    %v404 = vadd.f32 0.0, %v403
    %v405 = vpop.f32.mrb[0].mxu0
    %v406 = vpop.f32.mrb[0].mxu0
    %v407 = vadd.f32 0.0, %v406
    %v408 = vpop.f32.mrb[0].mxu0
    %409 = vdwg.mxu0
    %v410 = vadd.f32 %v359, %v404
    %v411 = vadd.f32 %v360, %v407
    %412 = vst [vmem:[#allocation7] sm:$0xff] %v410
    %413 = vst [vmem:[#allocation7 + $0x8] sm:$0xff] %v411
    // Predicated region
    $region22: #{tpu_custom_call.1} parent=1 // pred_check
      _
    $region23: #{tpu_custom_call.1} parent=1 // pred_check_branch
      %415 = sbr.rel (0) target = $region25
    $region24: #{tpu_custom_call.1} parent=1 // pred_region
      %s417 = ssub.s32 256, 256
      %418 = vsyncadd [#allocation4], %s417
      %s419 = sshll.u32 [#allocation7], 4
      %s420 = int_to_ptr.vmem [resolvable:$true] %s419
      %425 = dma.vmem_to_hbm [thread:$0]  %s420, 256, %s2, [#allocation4], 128, 128, 8
    $region25: #{tpu_custom_call.1} parent=1 // pred_fallthru
      _
    // Predicated region
    $region26: #{tpu_custom_call.1} parent=1 // pred_check
      _
    $region27: #{tpu_custom_call.1} parent=1 // pred_check_branch
      %427 = sbr.rel (0) target = $region29
    $region28: #{tpu_custom_call.1} parent=1 // pred_region
      %428 = dma.done [#allocation4], 256
    $region29: #{tpu_custom_call.1} parent=1 // pred_fallthru
      _
    %429 = vsyncpa [#allocation3], 1
    %430 = vsyncpa [#allocation6], 1
    %431 = vsyncpa [#allocation4], 1

</llo_original>
